<compile_context>
chip_gen: v6e
topology: v6e:2x2x1
jax: 0.10.0
libtpu: 0.0.40
codegen_flags: <defaults>
</compile_context>

<pallas_src>
import functools
import math

import jax
import jax.numpy as jnp
from jax.experimental import pallas as pl
from jax.experimental.pallas import tpu as pltpu


# ---------------------------------------------------------------------------
# Tile selection (per TPU generation)
# ---------------------------------------------------------------------------
def _round_up(x, m):
    return (x + m - 1) // m * m


@functools.lru_cache(maxsize=1)
def _preferred_tile():
    """128x128 MXU generations get 128 tiles; 256x256 MXU (v6e/v7x) get 256."""
    try:
        kind = jax.devices()[0].device_kind.lower()
    except Exception:
        return 256
    for tag in ("v2", "v3", "v4", "v5"):
        if tag in kind:
            return 128
    return 256


# 48 MiB is within every generation's physical VMEM (v7x has only 64 MiB/TC).
_VMEM_LIMIT = 48 * 1024 * 1024
# Above this K extent the matmul switches to the K-tiled accumulator path.
_K_TILE_MAX = 2048


def _pick_k_tile(K, max_tk=_K_TILE_MAX):
    """Largest divisor of K that is a multiple of 128 and <= max_tk."""
    if K <= max_tk:
        return K
    for mult in range(max_tk // 128, 0, -1):
        tk = mult * 128
        if K % tk == 0:
            return tk
    return K  # no clean divisor -> fall back to untiled K


# ---------------------------------------------------------------------------
# Pallas kernels
# ---------------------------------------------------------------------------
def _mm_bias_kernel(a_ref, b_ref, shift_ref, o_ref, *, relu):
    """out = relu?( (A @ B) + shift )  — bf16 operands, f32 accumulate."""
    acc = jnp.dot(a_ref[...], b_ref[...], preferred_element_type=jnp.float32)
    out = acc + shift_ref[...]
    if relu:
        out = jnp.maximum(out, 0.0)
    o_ref[...] = out.astype(o_ref.dtype)


def _mm_bias_res_kernel(a_ref, b_ref, shift_ref, res_ref, o_ref, *, relu):
    """out = relu?( (A @ B) + shift + residual )."""
    acc = jnp.dot(a_ref[...], b_ref[...], preferred_element_type=jnp.float32)
    out = acc + shift_ref[...] + res_ref[...].astype(jnp.float32)
    if relu:
        out = jnp.maximum(out, 0.0)
    o_ref[...] = out.astype(o_ref.dtype)


def _mm_bias_acc_kernel(a_ref, b_ref, shift_ref, o_ref, acc_ref, *, relu):
    """K-tiled: f32 accumulator in VMEM scratch, epilogue on the last K step."""
    k = pl.program_id(2)

    @pl.when(k == 0)
    def _():
        acc_ref[...] = jnp.zeros_like(acc_ref)

    acc_ref[...] += jnp.dot(a_ref[...], b_ref[...],
                            preferred_element_type=jnp.float32)

    @pl.when(k == pl.num_programs(2) - 1)
    def _():
        out = acc_ref[...] + shift_ref[...]
        if relu:
            out = jnp.maximum(out, 0.0)
        o_ref[...] = out.astype(o_ref.dtype)


def _mm_bias_res_acc_kernel(a_ref, b_ref, shift_ref, res_ref, o_ref, acc_ref,
                            *, relu):
    """K-tiled variant with fused residual add in the epilogue."""
    k = pl.program_id(2)

    @pl.when(k == 0)
    def _():
        acc_ref[...] = jnp.zeros_like(acc_ref)

    acc_ref[...] += jnp.dot(a_ref[...], b_ref[...],
                            preferred_element_type=jnp.float32)

    @pl.when(k == pl.num_programs(2) - 1)
    def _():
        out = acc_ref[...] + shift_ref[...] + res_ref[...].astype(jnp.float32)
        if relu:
            out = jnp.maximum(out, 0.0)
        o_ref[...] = out.astype(o_ref.dtype)


def _maxpool_kernel(p_ref, o_ref):
    """p_ref: (tm, KK, C) window patches -> max over KK (sublane reduce)."""
    o_ref[...] = jnp.max(p_ref[...].astype(jnp.float32), axis=1).astype(o_ref.dtype)


def _avgpool_fc_kernel(x_ref, w_ref, b_ref, o_ref):
    """Fused global-avg-pool + FC:  mean_HW(x) @ W + b  (f32 accumulate)."""
    hw = x_ref.shape[1]
    pooled = jnp.sum(x_ref[...].astype(jnp.float32), axis=1) * (1.0 / float(hw))
    acc = jnp.dot(pooled.astype(w_ref.dtype), w_ref[...],
                  preferred_element_type=jnp.float32)
    o_ref[...] = (acc + b_ref[...]).astype(o_ref.dtype)


# ---------------------------------------------------------------------------
# Pallas wrappers
# ---------------------------------------------------------------------------
def matmul_bias(A, B, shift, residual=None, relu=True, out_dtype=jnp.bfloat16):
    """A:(M,K) bf16 @ B:(K,N) bf16, + per-column shift (f32), + optional
    residual (M,N) bf16, optional relu.  (M,N[,K]) grid."""
    M, K = A.shape
    N = B.shape[1]
    tile = _preferred_tile()

    # M tiling: full-dim block if small (handles ragged M), else pad to tile.
    if M <= tile:
        tm, Mp = M, M
    else:
        tm = tile
        Mp = _round_up(M, tm)

    # N tiling: full-dim block if small / ragged, else tile (gives the second
    # TensorCore work on v7x even when M collapses to a handful of rows).
    if N <= tile:
        tn = N
    elif N % tile == 0:
        tn = tile
    elif N % 128 == 0:
        tn = 128
    else:
        tn = N

    tk = _pick_k_tile(K)
    nk = K // tk
    k_tiled = nk > 1

    Ap = A if Mp == M else jnp.pad(A, ((0, Mp - M), (0, 0)))
    shift2 = shift.reshape(1, N).astype(jnp.float32)

    args = [Ap, B, shift2]
    if k_tiled:
        grid = (Mp // tm, N // tn, nk)
        in_specs = [
            pl.BlockSpec((tm, tk), lambda i, j, k: (i, k)),
            pl.BlockSpec((tk, tn), lambda i, j, k: (k, j)),
            pl.BlockSpec((1, tn), lambda i, j, k: (0, j)),
        ]
        out_spec = pl.BlockSpec((tm, tn), lambda i, j, k: (i, j))
        scratch = [pltpu.VMEM((tm, tn), jnp.float32)]
        semantics = ("parallel", "parallel", "arbitrary")
    else:
        grid = (Mp // tm, N // tn)
        in_specs = [
            pl.BlockSpec((tm, K), lambda i, j: (i, 0)),
            pl.BlockSpec((K, tn), lambda i, j: (0, j)),
            pl.BlockSpec((1, tn), lambda i, j: (0, j)),
        ]
        out_spec = pl.BlockSpec((tm, tn), lambda i, j: (i, j))
        scratch = []
        semantics = ("parallel", "parallel")

    if residual is not None:
        rp = residual.astype(A.dtype)
        if Mp != M:
            rp = jnp.pad(rp, ((0, Mp - M), (0, 0)))
        args.append(rp)
        if k_tiled:
            in_specs.append(pl.BlockSpec((tm, tn), lambda i, j, k: (i, j)))
            kernel = functools.partial(_mm_bias_res_acc_kernel, relu=relu)
        else:
            in_specs.append(pl.BlockSpec((tm, tn), lambda i, j: (i, j)))
            kernel = functools.partial(_mm_bias_res_kernel, relu=relu)
    else:
        if k_tiled:
            kernel = functools.partial(_mm_bias_acc_kernel, relu=relu)
        else:
            kernel = functools.partial(_mm_bias_kernel, relu=relu)

    out = pl.pallas_call(
        kernel,
        out_shape=jax.ShapeDtypeStruct((Mp, N), out_dtype),
        grid_spec=pltpu.PrefetchScalarGridSpec(
            num_scalar_prefetch=0,
            grid=grid,
            in_specs=in_specs,
            out_specs=out_spec,
            scratch_shapes=scratch,
        ),
        compiler_params=pltpu.CompilerParams(
            dimension_semantics=semantics,
            vmem_limit_bytes=_VMEM_LIMIT,
        ),
    )(*args)
    if Mp != M:
        out = out[:M]
    return out


def extract_patches(x, kh, kw, stride, pad, pad_value=0.0):
    """x: (N,H,W,C) -> patches (N,Ho,Wo,kh*kw,C). Pure glue (slicing/stacking)."""
    N, H, W, C = x.shape
    xp = jnp.pad(x, ((0, 0), (pad, pad), (pad, pad), (0, 0)),
                 constant_values=pad_value)
    Ho = (H + 2 * pad - kh) // stride + 1
    Wo = (W + 2 * pad - kw) // stride + 1
    cols = []
    for i in range(kh):
        for j in range(kw):
            cols.append(xp[:, i:i + stride * (Ho - 1) + 1:stride,
                           j:j + stride * (Wo - 1) + 1:stride, :])
    patches = jnp.stack(cols, axis=3)  # (N, Ho, Wo, kh*kw, C)
    return patches, Ho, Wo


def conv_bn_act(x, cw, stride, padding, residual=None, relu=True):
    """Conv2d (no bias) with BN scale pre-folded into weights + shift
    (+ optional residual, optional ReLU).  x: (N,H,W,Cin) NHWC bf16;
    cw: prepared dict with bf16 weight matrix 'B', f32 'shift', kh, kw."""
    N, H, W, Cin = x.shape
    kh, kw = cw["kh"], cw["kw"]
    if kh == 1 and kw == 1:
        # 1x1 conv: no im2col needed, strided subsample is plain slicing glue.
        xs = x[:, ::stride, ::stride, :] if stride > 1 else x
        Ho, Wo = xs.shape[1], xs.shape[2]
        A = xs.reshape(N * Ho * Wo, Cin)
    else:
        patches, Ho, Wo = extract_patches(x, kh, kw, stride, padding, 0.0)
        A = patches.reshape(N * Ho * Wo, kh * kw * Cin)
    res = None if residual is None else residual.reshape(N * Ho * Wo, -1)
    out = matmul_bias(A, cw["B"], cw["shift"], residual=res, relu=relu,
                      out_dtype=jnp.bfloat16)
    return out.reshape(N, Ho, Wo, -1)


def maxpool_3x3_s2(x):
    N, H, W, C = x.shape
    patches, Ho, Wo = extract_patches(x, 3, 3, 2, 1, pad_value=float("-inf"))
    M = N * Ho * Wo
    p = patches.reshape(M, 9, C)
    tm = M if M <= 512 else 256
    Mp = _round_up(M, tm)
    if Mp != M:
        p = jnp.pad(p, ((0, Mp - M), (0, 0), (0, 0)),
                    constant_values=float("-inf"))
    out = pl.pallas_call(
        _maxpool_kernel,
        out_shape=jax.ShapeDtypeStruct((Mp, C), x.dtype),
        grid_spec=pltpu.PrefetchScalarGridSpec(
            num_scalar_prefetch=0,
            grid=(Mp // tm,),
            in_specs=[pl.BlockSpec((tm, 9, C), lambda i: (i, 0, 0))],
            out_specs=pl.BlockSpec((tm, C), lambda i: (i, 0)),
        ),
        compiler_params=pltpu.CompilerParams(
            dimension_semantics=("parallel",),
            vmem_limit_bytes=_VMEM_LIMIT,
        ),
    )(p)
    if Mp != M:
        out = out[:M]
    return out.reshape(N, Ho, Wo, C)


def avgpool_fc(x, fc):
    """Fused global average pool + Linear.  x: (N,H,W,C) bf16 -> (N, classes) f32."""
    N, H, W, C = x.shape
    num_classes = fc["B"].shape[1]
    xr = x.reshape(N, H * W, C)
    bn = N if N <= 8 else 8
    Np_ = _round_up(N, bn)
    if Np_ != N:
        xr = jnp.pad(xr, ((0, Np_ - N), (0, 0), (0, 0)))
    b2 = fc["shift"].reshape(1, num_classes).astype(jnp.float32)
    out = pl.pallas_call(
        _avgpool_fc_kernel,
        out_shape=jax.ShapeDtypeStruct((Np_, num_classes), jnp.float32),
        grid_spec=pltpu.PrefetchScalarGridSpec(
            num_scalar_prefetch=0,
            grid=(Np_ // bn,),
            in_specs=[
                pl.BlockSpec((bn, H * W, C), lambda i: (i, 0, 0)),
                pl.BlockSpec((C, num_classes), lambda i: (0, 0)),
                pl.BlockSpec((1, num_classes), lambda i: (0, 0)),
            ],
            out_specs=pl.BlockSpec((bn, num_classes), lambda i: (i, 0)),
        ),
        compiler_params=pltpu.CompilerParams(
            dimension_semantics=("parallel",),
            vmem_limit_bytes=_VMEM_LIMIT,
        ),
    )(xr, fc["B"], b2)
    return out[:N]


# ---------------------------------------------------------------------------
# Parameter init (deterministic, mimics the module's __init__)
# ---------------------------------------------------------------------------
def _kaiming_conv(key, shape):
    # shape = (out, in, kh, kw); kaiming_normal_, mode='fan_out', relu gain
    fan_out = shape[0] * shape[2] * shape[3]
    std = math.sqrt(2.0 / fan_out)
    return std * jax.random.normal(key, shape, jnp.float32)


def _bn_affine(c, eps=1e-5):
    gamma = jnp.ones((c,), jnp.float32)
    beta = jnp.zeros((c,), jnp.float32)
    mean = jnp.zeros((c,), jnp.float32)
    var = jnp.ones((c,), jnp.float32)
    scale = gamma / jnp.sqrt(var + eps)
    shift = beta - mean * scale
    return scale, shift


def init_resnet18_params(key, num_classes=7):
    layers = [2, 2, 2, 2]          # BasicBlock, expansion = 1
    planes_list = [64, 128, 256, 512]
    keys = iter(jax.random.split(key, 32))

    p = {"conv1_w": _kaiming_conv(next(keys), (64, 1, 7, 7)),
         "bn1": _bn_affine(64)}

    inplanes = 64
    all_layers = []
    for li, (planes, nblocks) in enumerate(zip(planes_list, layers)):
        layer_stride = 1 if li == 0 else 2
        blocks = []
        for bi in range(nblocks):
            s = layer_stride if bi == 0 else 1
            bp = {
                "stride": s,
                "conv1_w": _kaiming_conv(next(keys), (planes, inplanes, 3, 3)),
                "bn1": _bn_affine(planes),
                "conv2_w": _kaiming_conv(next(keys), (planes, planes, 3, 3)),
                "bn2": _bn_affine(planes),
            }
            if s != 1 or inplanes != planes:
                bp["down_w"] = _kaiming_conv(next(keys), (planes, inplanes, 1, 1))
                bp["down_bn"] = _bn_affine(planes)
            blocks.append(bp)
            inplanes = planes
        all_layers.append(blocks)
    p["layers"] = all_layers

    kw_, kb_ = jax.random.split(next(keys))
    bound = 1.0 / math.sqrt(512)
    p["fc_w"] = jax.random.uniform(kw_, (num_classes, 512), jnp.float32,
                                   -bound, bound)
    p["fc_b"] = jax.random.uniform(kb_, (num_classes,), jnp.float32,
                                   -bound, bound)
    return p


# ---------------------------------------------------------------------------
# One-time weight preparation (done OUTSIDE the forward hot path):
# transpose OIHW -> (kh*kw*Cin, Cout), fold the BN scale into the columns,
# cast to bf16; keep only a single f32 shift vector per conv.
# ---------------------------------------------------------------------------
def _prep_conv(w, bn):
    scale, shift = bn
    cout, cin, kh, kw = w.shape
    Bm = jnp.transpose(w, (2, 3, 1, 0)).reshape(kh * kw * cin, cout)
    Bm = (Bm * scale[None, :]).astype(jnp.bfloat16)
    return {"B": Bm, "shift": shift.astype(jnp.float32),
            "kh": int(kh), "kw": int(kw)}


def prepare_params(p):
    prep = {"conv1": _prep_conv(p["conv1_w"], p["bn1"]), "layers": []}
    for blocks in p["layers"]:
        pbs = []
        for bp in blocks:
            d = {"stride": bp["stride"],
                 "conv1": _prep_conv(bp["conv1_w"], bp["bn1"]),
                 "conv2": _prep_conv(bp["conv2_w"], bp["bn2"])}
            if "down_w" in bp:
                d["down"] = _prep_conv(bp["down_w"], bp["down_bn"])
            pbs.append(d)
        prep["layers"].append(pbs)
    prep["fc"] = {"B": p["fc_w"].T.astype(jnp.bfloat16),
                  "shift": p["fc_b"].astype(jnp.float32)}
    return prep


# ---------------------------------------------------------------------------
# Forward pass
# ---------------------------------------------------------------------------
def basic_block_forward(x, bp):
    s = bp["stride"]
    if "down" in bp:
        identity = conv_bn_act(x, bp["down"], stride=s, padding=0, relu=False)
    else:
        identity = x
    out = conv_bn_act(x, bp["conv1"], stride=s, padding=1, relu=True)
    out = conv_bn_act(out, bp["conv2"], stride=1, padding=1,
                      residual=identity, relu=True)
    return out


def resnet_forward(prep, x_nchw, first_stride=2):
    # layout: convert PyTorch NCHW input to NHWC bf16 for the TPU kernels.
    x = jnp.transpose(x_nchw, (0, 2, 3, 1)).astype(jnp.bfloat16)

    x = conv_bn_act(x, prep["conv1"], stride=first_stride, padding=3, relu=True)
    x = maxpool_3x3_s2(x)

    for blocks in prep["layers"]:
        for bp in blocks:
            x = basic_block_forward(x, bp)

    y = avgpool_fc(x, prep["fc"])          # fused global-avg-pool + FC
    return y                               # (N, num_classes) f32


# ---------------------------------------------------------------------------
if __name__ == "__main__":
    key = jax.random.PRNGKey(0)
    kx, kp = jax.random.split(key)

    # Small input consistent with the module: 1 input channel (conv1 is 1->64).
    x = jax.random.normal(kx, (2, 1, 32, 32), jnp.float32)   # NCHW
    params = init_resnet18_params(kp, num_classes=7)
    prep = prepare_params(params)                            # weights prepped once

    y = resnet_forward(prep, x)
    y = jax.block_until_ready(y)
    assert y.shape == (2, 7), y.shape
    assert bool(jnp.all(jnp.isfinite(y)))
    print("KERNEL_OK")
</pallas_src>

<mosaic_0001>
module attributes {stable_mosaic.version = 11 : i64} {
  func.func @_mm_bias_kernel(%arg0: i32, %arg1: i32, %arg2: memref<256x49xbf16, #tpu.memory_space<vmem>>, %arg3: memref<49x64xbf16, #tpu.memory_space<vmem>>, %arg4: memref<1x64xf32, #tpu.memory_space<vmem>>, %arg5: memref<256x64xbf16, #tpu.memory_space<vmem>>) attributes {dimension_semantics = [#tpu.dimension_semantics<parallel>, #tpu.dimension_semantics<parallel>], iteration_bounds = array<i64: 2, 1>, scalar_prefetch = 0 : i64, scratch_operands = 0 : i64, tpu.core_type = #tpu.core_type<tc>, window_params = [{transform_indices = @transform_0, window_bounds = array<i64: 256, 49>}, {transform_indices = @transform_1, window_bounds = array<i64: 49, 64>}, {transform_indices = @transform_2, window_bounds = array<i64: 1, 64>}, {transform_indices = @transform_3, window_bounds = array<i64: 256, 64>}]} {
    %c0 = arith.constant 0 : index
    %c0_0 = arith.constant 0 : index
    %0 = vector.load %arg2[%c0, %c0_0] : memref<256x49xbf16, #tpu.memory_space<vmem>>, vector<256x49xbf16>
    %c0_1 = arith.constant 0 : index
    %c0_2 = arith.constant 0 : index
    %1 = vector.load %arg3[%c0_1, %c0_2] : memref<49x64xbf16, #tpu.memory_space<vmem>>, vector<49x64xbf16>
    %cst = arith.constant dense<0.000000e+00> : vector<256x64xf32>
    %2 = tpu.matmul %0, %1, %cst {dimension_numbers = #tpu.dot_dimension_numbers<[1], [0], [0], [1], [0, 0, 1, 1], [], []>} : vector<256x49xbf16>, vector<49x64xbf16>, vector<256x64xf32> -> vector<256x64xf32>
    %c0_3 = arith.constant 0 : index
    %c0_4 = arith.constant 0 : index
    %3 = vector.load %arg4[%c0_3, %c0_4] : memref<1x64xf32, #tpu.memory_space<vmem>>, vector<1x64xf32>
    %4 = vector.broadcast %3 : vector<1x64xf32> to vector<256x64xf32>
    %5 = arith.addf %2, %4 : vector<256x64xf32>
    %cst_5 = arith.constant 0.000000e+00 : f32
    %6 = vector.broadcast %cst_5 : f32 to vector<256x64xf32>
    %7 = arith.maximumf %5, %6 : vector<256x64xf32>
    %8 = arith.truncf %7 : vector<256x64xf32> to vector<256x64xbf16>
    %c0_6 = arith.constant 0 : index
    %c0_7 = arith.constant 0 : index
    %9 = vector.load %arg5[%c0_6, %c0_7] : memref<256x64xbf16, #tpu.memory_space<vmem>>, vector<256x64xbf16>
    tpu.vector_store %arg5[%c0_6, %c0_7], %8 {strides = array<i32>} : memref<256x64xbf16, #tpu.memory_space<vmem>>, vector<256x64xbf16>,
    return
  }
  func.func @transform_0(%arg0: i32, %arg1: i32) -> (i32, i32) {
    %c0_i32 = arith.constant 0 : i32
    %c0_i32_0 = arith.constant 0 : i32
    return %arg0, %c0_i32 : i32, i32
  }
  func.func @transform_1(%arg0: i32, %arg1: i32) -> (i32, i32) {
    %c0_i32 = arith.constant 0 : i32
    %c0_i32_0 = arith.constant 0 : i32
    return %c0_i32, %arg1 : i32, i32
  }
  func.func @transform_2(%arg0: i32, %arg1: i32) -> (i32, i32) {
    %c0_i32 = arith.constant 0 : i32
    %c0_i32_0 = arith.constant 0 : i32
    return %c0_i32, %arg1 : i32, i32
  }
  func.func @transform_3(%arg0: i32, %arg1: i32) -> (i32, i32) {
    %c0_i32 = arith.constant 0 : i32
    return %arg0, %arg1 : i32, i32
  }
}

</mosaic_0001>

<llo_original>
// kernel: tpu_custom_call.1
$region0: #{tpu_custom_call.1}
  #allocation0 [shape = 'u32[]', space=smem, size = 0x4, offset = 0x4, fixed_abs, tag = 'smem constant byte address 0x4 - core index']
  #allocation1 [shape = 'u32[144,128]{1,0:T(1,128)}', space=vmem, size = 0x12000, scoped, tag = 'internal scratch']
  %s0 = inlined_call_operand.vmem [shape: bf16[512,49], index: 0, kind: input, shape index: {}]
  %s1 = inlined_call_operand.vmem [shape: bf16[49,64], index: 1, kind: input, shape index: {}]
  %s2 = inlined_call_operand.vmem [shape: f32[1,64], index: 2, kind: input, shape index: {}]
  %s3 = inlined_call_operand.vmem [shape: bf16[512,64], index: 3, kind: output, shape index: {}]
  %s4 = sld [smem:[#allocation0]]
  $region45: #{tpu_custom_call.1} parent=0
    _
  %s6 = ssub.s32 1, %s4
  %s7 = scalar_select 0, %s6, %s4
  loop: start=0, step=1, limit=4
  $region2: #{tpu_custom_call.1} parent=0 // loop_pre_header
    _
  $region3: #{tpu_custom_call.1} parent=0 // loop_header
    %s9 = sphi 0, %s13
    %p10 = scmp.ge.s32.totalorder %s9, 4
    %s16 = sphi 0, %s28
    %s17 = sphi 0, %s24
    %s18 = sphi 0, %s16
    %s19 = sphi 0, %s17
    %s20 = sphi 0, %s18
    %s21 = sphi 0, %s19
    %s31 = sphi 0, %s33
    %s34 = sphi 0, %s31
    %s35 = sphi 0, %s34
    %s51 = sphi 0, %s35
    %s57 = sphi 0, %s59
    %s60 = sphi 0, %s57
    %s61 = sphi 0, %s60
    %s77 = sphi 0, %s61
    %s83 = sphi 0, %s85
    %s86 = sphi 0, %s83
    %s87 = sphi 0, %s86
    %s103 = sphi 0, %s87
    %s111 = sphi 0, %s113
    %s114 = sphi 0, %s111
    %s115 = sphi 0, %s114
    %s131 = sphi 0, %s115
  $region4: #{tpu_custom_call.1} parent=0 // loop_header_branch
    %12 = sbr.rel (%p10) target = $region8
  $region5: #{tpu_custom_call.1} parent=0 // loop_body
    %s14 = ssub.s32 %s9, 1
    %s15 = ssub.s32 %s9, 2
    %s22 = sadd.s32 1, %s17
    %p23 = scmp.ge.s32.totalorder %s22, 1
    %s24 = scalar_select %p23, 0, %s22
    %s25 = sadd.s32 1, %s16
    %s26 = scalar_select %p23, %s25, %s16
    %p27 = scmp.ge.s32.totalorder %s26, 2
    %s28 = scalar_select %p27, 0, %s26
    %s29 = ssub.s32 %s16, %s28
    %p30 = scmp.eq.s32.totalorder %s29, 0
    %s32 = sadd.s32 %s31, 1
    %s33 = scalar_select %p30, %s31, %s32
    %p36 = pneg %p30
    %p37 = scmp.eq.s32.totalorder %s9, 1
    %p38 = por %p36, %p37
    %p39 = scmp.ne.s32.totalorder %s31, %s34
    %p40 = scmp.eq.s32.totalorder %s9, 0
    %p41 = por %p39, %p40
    %p42 = scmp.ne.s32.totalorder %s31, %s34
    %p43 = scmp.eq.s32.totalorder %s14, 1
    %p44 = por %p42, %p43
    %p45 = scmp.ne.s32.totalorder %s34, %s35
    %p46 = scmp.eq.s32.totalorder %s14, 0
    %p47 = por %p45, %p46
    %p48 = scmp.ne.s32.totalorder %s34, %s35
    %p49 = scmp.eq.s32.totalorder %s15, 1
    %p50 = por %p48, %p49
    %p52 = scmp.ne.s32.totalorder %s35, %s51
    %p53 = scmp.eq.s32.totalorder %s15, 0
    %p54 = por %p52, %p53
    %s55 = ssub.s32 %s17, %s24
    %p56 = scmp.eq.s32.totalorder %s55, 0
    %s58 = sadd.s32 %s57, 1
    %s59 = scalar_select %p56, %s57, %s58
    %p62 = pneg %p56
    %p63 = scmp.eq.s32.totalorder %s9, 1
    %p64 = por %p62, %p63
    %p65 = scmp.ne.s32.totalorder %s57, %s60
    %p66 = scmp.eq.s32.totalorder %s9, 0
    %p67 = por %p65, %p66
    %p68 = scmp.ne.s32.totalorder %s57, %s60
    %p69 = scmp.eq.s32.totalorder %s14, 1
    %p70 = por %p68, %p69
    %p71 = scmp.ne.s32.totalorder %s60, %s61
    %p72 = scmp.eq.s32.totalorder %s14, 0
    %p73 = por %p71, %p72
    %p74 = scmp.ne.s32.totalorder %s60, %s61
    %p75 = scmp.eq.s32.totalorder %s15, 1
    %p76 = por %p74, %p75
    %p78 = scmp.ne.s32.totalorder %s61, %s77
    %p79 = scmp.eq.s32.totalorder %s15, 0
    %p80 = por %p78, %p79
    %s81 = ssub.s32 %s17, %s24
    %p82 = scmp.eq.s32.totalorder %s81, 0
    %s84 = sadd.s32 %s83, 1
    %s85 = scalar_select %p82, %s83, %s84
    %p88 = pneg %p82
    %p89 = scmp.eq.s32.totalorder %s9, 1
    %p90 = por %p88, %p89
    %p91 = scmp.ne.s32.totalorder %s83, %s86
    %p92 = scmp.eq.s32.totalorder %s9, 0
    %p93 = por %p91, %p92
    %p94 = scmp.ne.s32.totalorder %s83, %s86
    %p95 = scmp.eq.s32.totalorder %s14, 1
    %p96 = por %p94, %p95
    %p97 = scmp.ne.s32.totalorder %s86, %s87
    %p98 = scmp.eq.s32.totalorder %s14, 0
    %p99 = por %p97, %p98
    %p100 = scmp.ne.s32.totalorder %s86, %s87
    %p101 = scmp.eq.s32.totalorder %s15, 1
    %p102 = por %p100, %p101
    %p104 = scmp.ne.s32.totalorder %s87, %s103
    %p105 = scmp.eq.s32.totalorder %s15, 0
    %p106 = por %p104, %p105
    %s107 = ssub.s32 %s16, %s28
    %s108 = ssub.s32 %s17, %s24
    %s109 = sor.u32 %s107, %s108
    %p110 = scmp.eq.s32.totalorder %s109, 0
    %s112 = sadd.s32 %s111, 1
    %s113 = scalar_select %p110, %s111, %s112
    %p116 = pneg %p110
    %p117 = scmp.eq.s32.totalorder %s9, 1
    %p118 = por %p116, %p117
    %p119 = scmp.ne.s32.totalorder %s111, %s114
    %p120 = scmp.eq.s32.totalorder %s9, 0
    %p121 = por %p119, %p120
    %p122 = scmp.ne.s32.totalorder %s111, %s114
    %p123 = scmp.eq.s32.totalorder %s14, 1
    %p124 = por %p122, %p123
    %p125 = scmp.ne.s32.totalorder %s114, %s115
    %p126 = scmp.eq.s32.totalorder %s14, 0
    %p127 = por %p125, %p126
    %p128 = scmp.ne.s32.totalorder %s114, %s115
    %p129 = scmp.eq.s32.totalorder %s15, 1
    %p130 = por %p128, %p129
    %p132 = scmp.ne.s32.totalorder %s115, %s131
    %p133 = scmp.eq.s32.totalorder %s15, 0
    %p134 = por %p132, %p133
    %p135 = scmp.le.s32.totalorder 1, %s9
    %p136 = scmp.lt.s32.totalorder %s9, 3
    %p137 = pnand %p135, %p136
    %p138 = pneg %p137
    // Predicated region
    $region9: #{tpu_custom_call.1} parent=5 // pred_check
      _
    $region10: #{tpu_custom_call.1} parent=5 // pred_check_branch
      %140 = sbr.rel (%p137) target = $region12
    $region11: #{tpu_custom_call.1} parent=5 // pred_region
      %s141 = ssub.s32 %s9, 1
      // Predicated region
      $region13: #{tpu_custom_call.1} parent=11 // pred_check
        %p142 = pneg %p73
      $region14: #{tpu_custom_call.1} parent=11 // pred_check_branch
        %144 = sbr.rel (%p142) target = $region16
      $region15: #{tpu_custom_call.1} parent=11 // pred_region
        %p145 = scmp.lt.s32.totalorder %s19, 0
        %s146 = scalar_select %p145, %s19, 0
        %s147 = smul.addr %s146, 4
        %s148 = scalar_lea.vmem %s1, %s147
      $region16: #{tpu_custom_call.1} parent=11 // pred_fallthru
        _
      // Predicated region
      $region17: #{tpu_custom_call.1} parent=11 // pred_check
        %p149 = pneg %p99
      $region18: #{tpu_custom_call.1} parent=11 // pred_check_branch
        %151 = sbr.rel (%p149) target = $region20
      $region19: #{tpu_custom_call.1} parent=11 // pred_region
        %p152 = scmp.lt.s32.totalorder %s19, 0
        %s153 = scalar_select %p152, %s19, 0
        %s154 = scalar_lea.vmem %s2, %s153
      $region20: #{tpu_custom_call.1} parent=11 // pred_fallthru
        _
    $region12: #{tpu_custom_call.1} parent=5 // pred_fallthru
      _
    %p155 = scmp.lt.s32.totalorder %s9, 2
    // Predicated region
    $region21: #{tpu_custom_call.1} parent=5 // pred_check
      %p156 = pneg %p155
    $region22: #{tpu_custom_call.1} parent=5 // pred_check_branch
      %158 = sbr.rel (%p156) target = $region24
    $region23: #{tpu_custom_call.1} parent=5 // pred_region
      // Predicated region
      $region25: #{tpu_custom_call.1} parent=23 // pred_check
        %p159 = pneg %p41
      $region26: #{tpu_custom_call.1} parent=23 // pred_check_branch
        %161 = sbr.rel (%p159) target = $region28
      $region27: #{tpu_custom_call.1} parent=23 // pred_region
        %s162 = smul.u32 32, %s16
        %p163 = scmp.lt.s32.totalorder %s162, 63
        %s164 = scalar_select %p163, %s162, 63
        %s165 = smul.addr %s164, 4
        %s166 = scalar_lea.vmem %s0, %s165
        %s167 = smul.u32 32, %s16
      $region28: #{tpu_custom_call.1} parent=23 // pred_fallthru
        _
    $region24: #{tpu_custom_call.1} parent=5 // pred_fallthru
      _
    %p168 = scmp.le.s32.totalorder 1, %s9
    %p169 = scmp.lt.s32.totalorder %s9, 3
    %p170 = pnand %p168, %p169
    %p171 = pneg %p170
    // Predicated region
    $region29: #{tpu_custom_call.1} parent=5 // pred_check
      _
    $region30: #{tpu_custom_call.1} parent=5 // pred_check_branch
      %173 = sbr.rel (%p170) target = $region32
    $region31: #{tpu_custom_call.1} parent=5 // pred_region
      %s174 = ssub.s32 %s9, 1
      %s175 = smul.u32 32, %s18
      %p176 = scmp.lt.s32.totalorder %s175, 63
      %s177 = scalar_select %p176, %s175, 63
      %s178 = smul.addr %s177, 4
      %s179 = scalar_lea.vmem %s0, %s178
      %p180 = pneg %p47
      %p181 = pneg %p44
      %p182 = scmp.lt.s32.totalorder %s19, 0
      %s183 = scalar_select %p182, %s19, 0
      %s184 = smul.addr %s183, 4
      %s185 = scalar_lea.vmem %s1, %s184
      %p186 = pneg %p73
      %p187 = pneg %p70
      %p188 = scmp.lt.s32.totalorder %s19, 0
      %s189 = scalar_select %p188, %s19, 0
      %s190 = scalar_lea.vmem %s2, %s189
      %p191 = pneg %p99
      %p192 = pneg %p96
      %p193 = pneg %p127
      %p194 = pneg %p124
      %s195 = smul.u32 32, %s18
      %p196 = scmp.lt.s32.totalorder %s195, 63
      %s197 = scalar_select %p196, %s195, 63
      %p198 = scmp.lt.s32.totalorder %s19, 0
      %s199 = scalar_select %p198, %s19, 0
      %s200 = sadd.s32 %s199, %s197
      %s201 = smul.addr %s200, 4
      %s202 = scalar_lea.vmem %s3, %s201
      %s203 = smul.u32 32, %s18
      %p204 = scmp.lt.s32.totalorder %s203, 63
      %s205 = scalar_select %p204, %s203, 63
      %s206 = smul.addr %s205, 4
      %s207 = scalar_lea.vmem %s0, %s206
      %s208 = smul.u32 32, %s18
      %p209 = scmp.lt.s32.totalorder %s19, 0
      %s210 = scalar_select %p209, %s19, 0
      %s211 = smul.addr %s210, 4
      %s212 = scalar_lea.vmem %s1, %s211
      %p213 = scmp.lt.s32.totalorder %s19, 0
      %s214 = scalar_select %p213, %s19, 0
      %s215 = scalar_lea.vmem %s2, %s214
      %s216 = smul.u32 32, %s18
      %p217 = scmp.lt.s32.totalorder %s216, 63
      %s218 = scalar_select %p217, %s216, 63
      %p219 = scmp.lt.s32.totalorder %s19, 0
      %s220 = scalar_select %p219, %s19, 0
      %s221 = sadd.s32 %s220, %s218
      %s222 = smul.addr %s221, 4
      %s223 = scalar_lea.vmem %s3, %s222
      %s224 = smul.u32 32, %s18
      %v226 = vld [vmem:[%s207] sm:$0xf]
      %v227 = vld [vmem:[%s207 + $0x4] sm:$0xf]
      %v228 = vld [vmem:[%s207 + $0x8] sm:$0xf]
      %v229 = vld [vmem:[%s207 + $0xc] sm:$0xf]
      %v230 = vld [vmem:[%s207 + $0x10] sm:$0xf]
      %v231 = vld [vmem:[%s207 + $0x14] sm:$0xf]
      %v232 = vld [vmem:[%s207 + $0x18] sm:$0xf]
      %v233 = vld [vmem:[%s207 + $0x1c] sm:$0xf]
      %v234 = vld [vmem:[%s207 + $0x20] sm:$0xf]
      %v235 = vld [vmem:[%s207 + $0x24] sm:$0xf]
      %v236 = vld [vmem:[%s207 + $0x28] sm:$0xf]
      %v237 = vld [vmem:[%s207 + $0x2c] sm:$0xf]
      %v238 = vld [vmem:[%s207 + $0x30] sm:$0xf]
      %v239 = vld [vmem:[%s207 + $0x34] sm:$0xf]
      %v240 = vld [vmem:[%s207 + $0x38] sm:$0xf]
      %v241 = vld [vmem:[%s207 + $0x3c] sm:$0xf]
      %v242 = vld [vmem:[%s207 + $0x40] sm:$0xf]
      %v243 = vld [vmem:[%s207 + $0x44] sm:$0xf]
      %v244 = vld [vmem:[%s207 + $0x48] sm:$0xf]
      %v245 = vld [vmem:[%s207 + $0x4c] sm:$0xf]
      %v246 = vld [vmem:[%s207 + $0x50] sm:$0xf]
      %v247 = vld [vmem:[%s207 + $0x54] sm:$0xf]
      %v248 = vld [vmem:[%s207 + $0x58] sm:$0xf]
      %v249 = vld [vmem:[%s207 + $0x5c] sm:$0xf]
      %v250 = vld [vmem:[%s207 + $0x60] sm:$0xf]
      %v251 = vld [vmem:[%s207 + $0x64] sm:$0xf]
      %v252 = vld [vmem:[%s207 + $0x68] sm:$0xf]
      %v253 = vld [vmem:[%s207 + $0x6c] sm:$0xf]
      %v254 = vld [vmem:[%s207 + $0x70] sm:$0xf]
      %v255 = vld [vmem:[%s207 + $0x74] sm:$0xf]
      %v256 = vld [vmem:[%s207 + $0x78] sm:$0xf]
      %v257 = vld [vmem:[%s207 + $0x7c] sm:$0xf]
      %v258 = vld [vmem:[%s212] sm:$0xf]
      %v259 = vld [vmem:[%s212 + $0x4] sm:$0xf]
      %v260 = vld [vmem:[%s212 + $0x8] sm:$0xf]
      %v261 = vld [vmem:[%s212 + $0xc] sm:$0xf]
      %v262 = vld [vmem:[%s212 + $0x10] sm:$0xf]
      %v263 = vld [vmem:[%s212 + $0x14] sm:$0xf]
      %v264 = vld [vmem:[%s212 + $0x18] sm:$0x1]
      %v265 = vld [vmem:[%s215] sm:$0x1]
      %v267 = vlaneseq
      %v268 = vshrl.u32 %v267, 7
      %v269 = vsub.s32 0, %v268
      %v270 = vrot.slane %v265, %v269
      %v304 = vunpack.c.l.b16 %v226
      %v305 = vunpack.c.l.b16 %v227
      %v306 = vunpack.c.l.b16 %v228
      %v307 = vunpack.c.l.b16 %v229
      %v308 = vunpack.c.l.b16 %v230
      %v309 = vunpack.c.l.b16 %v231
      %v310 = vunpack.c.l.b16 %v232
      %v311 = vunpack.c.l.b16 %v233
      %v312 = vunpack.c.l.b16 %v234
      %v313 = vunpack.c.l.b16 %v235
      %v314 = vunpack.c.l.b16 %v236
      %v315 = vunpack.c.l.b16 %v237
      %v316 = vunpack.c.l.b16 %v238
      %v317 = vunpack.c.l.b16 %v239
      %v318 = vunpack.c.l.b16 %v240
      %v319 = vunpack.c.l.b16 %v241
      %v320 = vunpack.c.l.b16 %v242
      %v321 = vunpack.c.l.b16 %v243
      %v322 = vunpack.c.l.b16 %v244
      %v323 = vunpack.c.l.b16 %v245
      %v324 = vunpack.c.l.b16 %v246
      %v325 = vunpack.c.l.b16 %v247
      %v326 = vunpack.c.l.b16 %v248
      %v327 = vunpack.c.l.b16 %v249
      %v328 = vunpack.c.l.b16 %v250
      %v329 = vunpack.c.l.b16 %v251
      %v330 = vunpack.c.l.b16 %v252
      %v331 = vunpack.c.l.b16 %v253
      %v332 = vunpack.c.l.b16 %v254
      %v333 = vunpack.c.l.b16 %v255
      %v334 = vunpack.c.l.b16 %v256
      %v335 = vunpack.c.l.b16 %v257
      %v336 = vpack.c.b16 %v305, %v304
      %v337 = vpack.c.b16 %v307, %v306
      %v338 = vpack.c.b16 %v309, %v308
      %v339 = vpack.c.b16 %v311, %v310
      %v340 = vpack.c.b16 %v313, %v312
      %v341 = vpack.c.b16 %v315, %v314
      %v342 = vpack.c.b16 %v317, %v316
      %v343 = vpack.c.b16 %v319, %v318
      %v344 = vpack.c.b16 %v321, %v320
      %v345 = vpack.c.b16 %v323, %v322
      %v346 = vpack.c.b16 %v325, %v324
      %v347 = vpack.c.b16 %v327, %v326
      %v348 = vpack.c.b16 %v329, %v328
      %v349 = vpack.c.b16 %v331, %v330
      %v350 = vpack.c.b16 %v333, %v332
      %v351 = vpack.c.b16 %v335, %v334
      %v359 = vunpack.c.l.b16 %v258
      %v360 = vunpack.c.l.b16 %v259
      %v361 = vunpack.c.l.b16 %v260
      %v362 = vunpack.c.l.b16 %v261
      %v363 = vunpack.c.l.b16 %v262
      %v364 = vunpack.c.l.b16 %v263
      %v365 = vunpack.c.l.b16 %v264
      %v366 = vpack.c.b16 %v360, %v359
      %v367 = vpack.c.b16 %v362, %v361
      %v368 = vpack.c.b16 %v364, %v363
      %v369 = vpack.c.b16 %v365, %v365
      %vm373 = vcmask 400384
      %v375 = vsel %vm373, %v336, 0
      %v378 = vsel %vm373, %v337, 0
      %v381 = vsel %vm373, %v338, 0
      %v384 = vsel %vm373, %v339, 0
      %v387 = vsel %vm373, %v340, 0
      %v390 = vsel %vm373, %v341, 0
      %v393 = vsel %vm373, %v342, 0
      %v396 = vsel %vm373, %v343, 0
      %v399 = vsel %vm373, %v344, 0
      %v402 = vsel %vm373, %v345, 0
      %v405 = vsel %vm373, %v346, 0
      %v408 = vsel %vm373, %v347, 0
      %v411 = vsel %vm373, %v348, 0
      %v414 = vsel %vm373, %v349, 0
      %v417 = vsel %vm373, %v350, 0
      %v420 = vsel %vm373, %v351, 0
      %vm422 = vcmask 1040384
      %v423 = vsel 0, 4294967295, 65535
      %v424 = vsel %vm422, %v423, 0
      %v426 = vand.u32 %v369, %v424
      %428 = vmatprep.subr.bf16.mxu0 0
      %429 = vmatpush1.bf16.msra.mxu0 0
      %430 = vmatprep.subr.bf16.mxu0 0
      %431 = vmatpush1.bf16.msra.mxu0 0
      %432 = vmatprep.subr.bf16.mxu0 0
      %433 = vmatpush1.bf16.msra.mxu0 0
      %434 = vmatprep.subr.bf16.mxu0 0
      %435 = vmatpush1.bf16.msra.mxu0 0
      %436 = vmatprep.subr.bf16.mxu0 0
      %437 = vmatpush1.bf16.msra.mxu0 %v426
      %438 = vmatprep.subr.bf16.mxu0 0
      %439 = vmatpush1.bf16.msra.mxu0 %v368
      %440 = vmatprep.subr.bf16.mxu0 0
      %441 = vmatpush1.bf16.msra.mxu0 %v367
      %442 = vmatprep.subr.bf16.mxu0 0
      %443 = vmatpush1.bf16.msra.mxu0 %v366
      %444 = vmatprep.subr.bf16.mxu0 0
      %445 = vmatpush2.bf16.msra.mxu0 0
      %446 = vmatprep.subr.bf16.mxu0 0
      %447 = vmatpush2.bf16.msra.mxu0 0
      %448 = vmatprep.subr.bf16.mxu0 0
      %449 = vmatpush2.bf16.msra.mxu0 0
      %450 = vmatprep.subr.bf16.mxu0 0
      %451 = vmatpush2.bf16.msra.mxu0 0
      %452 = vmatprep.subr.bf16.mxu0 0
      %453 = vmatpush2.bf16.msra.mxu0 0
      %454 = vmatprep.subr.bf16.mxu0 0
      %455 = vmatpush2.bf16.msra.mxu0 0
      %456 = vmatprep.subr.bf16.mxu0 0
      %457 = vmatpush2.bf16.msra.mxu0 0
      %458 = vmatprep.subr.bf16.mxu0 0
      %459 = vmatpush2.bf16.msra.mxu0 0
      %460 = vmatprep.mubr.bf16.mxu0 0
      %461 = vmatmul.mubr.bf16.gmra.mxu0 %v375
      %v462 = vpop.f32.mrf.mxu0
      %v463 = vadd.f32 %v270, %v462
      %v464 = vpop.f32.mrf.mxu0
      %v465 = vpop.f32.mrf.mxu0
      %v466 = vadd.f32 %v270, %v465
      %v467 = vpop.f32.mrf.mxu0
      %468 = vmatprep.mubr.bf16.mxu0 0
      %469 = vmatmul.mubr.bf16.gmra.mxu0 %v378
      %v470 = vpop.f32.mrf.mxu0
      %v471 = vadd.f32 %v270, %v470
      %v472 = vpop.f32.mrf.mxu0
      %v473 = vpop.f32.mrf.mxu0
      %v474 = vadd.f32 %v270, %v473
      %v475 = vpop.f32.mrf.mxu0
      %476 = vmatprep.mubr.bf16.mxu0 0
      %477 = vmatmul.mubr.bf16.gmra.mxu0 %v381
      %v478 = vpop.f32.mrf.mxu0
      %v479 = vadd.f32 %v270, %v478
      %v480 = vpop.f32.mrf.mxu0
      %v481 = vpop.f32.mrf.mxu0
      %v482 = vadd.f32 %v270, %v481
      %v483 = vpop.f32.mrf.mxu0
      %484 = vmatprep.mubr.bf16.mxu0 0
      %485 = vmatmul.mubr.bf16.gmra.mxu0 %v384
      %v486 = vpop.f32.mrf.mxu0
      %v487 = vadd.f32 %v270, %v486
      %v488 = vpop.f32.mrf.mxu0
      %v489 = vpop.f32.mrf.mxu0
      %v490 = vadd.f32 %v270, %v489
      %v491 = vpop.f32.mrf.mxu0
      %492 = vmatprep.mubr.bf16.mxu0 0
      %493 = vmatmul.mubr.bf16.gmra.mxu0 %v387
      %v494 = vpop.f32.mrf.mxu0
      %v495 = vadd.f32 %v270, %v494
      %v496 = vpop.f32.mrf.mxu0
      %v497 = vpop.f32.mrf.mxu0
      %v498 = vadd.f32 %v270, %v497
      %v499 = vpop.f32.mrf.mxu0
      %500 = vmatprep.mubr.bf16.mxu0 0
      %501 = vmatmul.mubr.bf16.gmra.mxu0 %v390
      %v502 = vpop.f32.mrf.mxu0
      %v503 = vadd.f32 %v270, %v502
      %v504 = vpop.f32.mrf.mxu0
      %v505 = vpop.f32.mrf.mxu0
      %v506 = vadd.f32 %v270, %v505
      %v507 = vpop.f32.mrf.mxu0
      %508 = vmatprep.mubr.bf16.mxu0 0
      %509 = vmatmul.mubr.bf16.gmra.mxu0 %v393
      %v510 = vpop.f32.mrf.mxu0
      %v511 = vadd.f32 %v270, %v510
      %v512 = vpop.f32.mrf.mxu0
      %v513 = vpop.f32.mrf.mxu0
      %v514 = vadd.f32 %v270, %v513
      %v515 = vpop.f32.mrf.mxu0
      %516 = vmatprep.mubr.bf16.mxu0 0
      %517 = vmatmul.mubr.bf16.gmra.mxu0 %v396
      %v518 = vpop.f32.mrf.mxu0
      %v519 = vadd.f32 %v270, %v518
      %v520 = vpop.f32.mrf.mxu0
      %v521 = vpop.f32.mrf.mxu0
      %v522 = vadd.f32 %v270, %v521
      %v523 = vpop.f32.mrf.mxu0
      %524 = vmatprep.mubr.bf16.mxu0 0
      %525 = vmatmul.mubr.bf16.gmra.mxu0 %v399
      %v526 = vpop.f32.mrf.mxu0
      %v527 = vadd.f32 %v270, %v526
      %v528 = vpop.f32.mrf.mxu0
      %v529 = vpop.f32.mrf.mxu0
      %v530 = vadd.f32 %v270, %v529
      %v531 = vpop.f32.mrf.mxu0
      %532 = vmatprep.mubr.bf16.mxu0 0
      %533 = vmatmul.mubr.bf16.gmra.mxu0 %v402
      %v534 = vpop.f32.mrf.mxu0
      %v535 = vadd.f32 %v270, %v534
      %v536 = vpop.f32.mrf.mxu0
      %v537 = vpop.f32.mrf.mxu0
      %v538 = vadd.f32 %v270, %v537
      %v539 = vpop.f32.mrf.mxu0
      %540 = vmatprep.mubr.bf16.mxu0 0
      %541 = vmatmul.mubr.bf16.gmra.mxu0 %v405
      %v542 = vpop.f32.mrf.mxu0
      %v543 = vadd.f32 %v270, %v542
      %v544 = vpop.f32.mrf.mxu0
      %v545 = vpop.f32.mrf.mxu0
      %v546 = vadd.f32 %v270, %v545
      %v547 = vpop.f32.mrf.mxu0
      %548 = vmatprep.mubr.bf16.mxu0 0
      %549 = vmatmul.mubr.bf16.gmra.mxu0 %v408
      %v550 = vpop.f32.mrf.mxu0
      %v551 = vadd.f32 %v270, %v550
      %v552 = vpop.f32.mrf.mxu0
      %v553 = vpop.f32.mrf.mxu0
      %v554 = vadd.f32 %v270, %v553
      %v555 = vpop.f32.mrf.mxu0
      %556 = vmatprep.mubr.bf16.mxu0 0
      %557 = vmatmul.mubr.bf16.gmra.mxu0 %v411
      %v558 = vpop.f32.mrf.mxu0
      %v559 = vadd.f32 %v270, %v558
      %v560 = vpop.f32.mrf.mxu0
      %v561 = vpop.f32.mrf.mxu0
      %v562 = vadd.f32 %v270, %v561
      %v563 = vpop.f32.mrf.mxu0
      %564 = vmatprep.mubr.bf16.mxu0 0
      %565 = vmatmul.mubr.bf16.gmra.mxu0 %v414
      %v566 = vpop.f32.mrf.mxu0
      %v567 = vadd.f32 %v270, %v566
      %v568 = vpop.f32.mrf.mxu0
      %v569 = vpop.f32.mrf.mxu0
      %v570 = vadd.f32 %v270, %v569
      %v571 = vpop.f32.mrf.mxu0
      %572 = vmatprep.mubr.bf16.mxu0 0
      %573 = vmatmul.mubr.bf16.gmra.mxu0 %v417
      %v574 = vpop.f32.mrf.mxu0
      %v575 = vadd.f32 %v270, %v574
      %v576 = vpop.f32.mrf.mxu0
      %v577 = vpop.f32.mrf.mxu0
      %v578 = vadd.f32 %v270, %v577
      %v579 = vpop.f32.mrf.mxu0
      %580 = vmatprep.mubr.bf16.mxu0 0
      %581 = vmatmul.mubr.bf16.gmra.mxu0 %v420
      %v582 = vpop.f32.mrf.mxu0
      %v583 = vadd.f32 %v270, %v582
      %v584 = vpop.f32.mrf.mxu0
      %v585 = vpop.f32.mrf.mxu0
      %v586 = vadd.f32 %v270, %v585
      %v587 = vpop.f32.mrf.mxu0
      %588 = vdwg.mxu0
      %v589 = vmax.f32 %v463, 0.0
      %v590 = vmax.f32 %v466, 0.0
      %v591 = vmax.f32 %v471, 0.0
      %v592 = vmax.f32 %v474, 0.0
      %v593 = vmax.f32 %v479, 0.0
      %v594 = vmax.f32 %v482, 0.0
      %v595 = vmax.f32 %v487, 0.0
      %v596 = vmax.f32 %v490, 0.0
      %v597 = vmax.f32 %v495, 0.0
      %v598 = vmax.f32 %v498, 0.0
      %v599 = vmax.f32 %v503, 0.0
      %v600 = vmax.f32 %v506, 0.0
      %v601 = vmax.f32 %v511, 0.0
      %v602 = vmax.f32 %v514, 0.0
      %v603 = vmax.f32 %v519, 0.0
      %v604 = vmax.f32 %v522, 0.0
      %v605 = vmax.f32 %v527, 0.0
      %v606 = vmax.f32 %v530, 0.0
      %v607 = vmax.f32 %v535, 0.0
      %v608 = vmax.f32 %v538, 0.0
      %v609 = vmax.f32 %v543, 0.0
      %v610 = vmax.f32 %v546, 0.0
      %v611 = vmax.f32 %v551, 0.0
      %v612 = vmax.f32 %v554, 0.0
      %v613 = vmax.f32 %v559, 0.0
      %v614 = vmax.f32 %v562, 0.0
      %v615 = vmax.f32 %v567, 0.0
      %v616 = vmax.f32 %v570, 0.0
      %v617 = vmax.f32 %v575, 0.0
      %v618 = vmax.f32 %v578, 0.0
      %v619 = vmax.f32 %v583, 0.0
      %v620 = vmax.f32 %v586, 0.0
      %v621 = vpack.c.bf16 %v590, %v589
      %v622 = vpack.c.bf16 %v592, %v591
      %v623 = vpack.c.bf16 %v594, %v593
      %v624 = vpack.c.bf16 %v596, %v595
      %v625 = vpack.c.bf16 %v598, %v597
      %v626 = vpack.c.bf16 %v600, %v599
      %v627 = vpack.c.bf16 %v602, %v601
      %v628 = vpack.c.bf16 %v604, %v603
      %v629 = vpack.c.bf16 %v606, %v605
      %v630 = vpack.c.bf16 %v608, %v607
      %v631 = vpack.c.bf16 %v610, %v609
      %v632 = vpack.c.bf16 %v612, %v611
      %v633 = vpack.c.bf16 %v614, %v613
      %v634 = vpack.c.bf16 %v616, %v615
      %v635 = vpack.c.bf16 %v618, %v617
      %v636 = vpack.c.bf16 %v620, %v619
      %v653 = vunpack.c.l.b16 %v621
      %v654 = vunpack.c.h.b16 %v621
      %v655 = vunpack.c.l.b16 %v622
      %v656 = vunpack.c.h.b16 %v622
      %v657 = vunpack.c.l.b16 %v623
      %v658 = vunpack.c.h.b16 %v623
      %v659 = vunpack.c.l.b16 %v624
      %v660 = vunpack.c.h.b16 %v624
      %v661 = vunpack.c.l.b16 %v625
      %v662 = vunpack.c.h.b16 %v625
      %v663 = vunpack.c.l.b16 %v626
      %v664 = vunpack.c.h.b16 %v626
      %v665 = vunpack.c.l.b16 %v627
      %v666 = vunpack.c.h.b16 %v627
      %v667 = vunpack.c.l.b16 %v628
      %v668 = vunpack.c.h.b16 %v628
      %v669 = vunpack.c.l.b16 %v629
      %v670 = vunpack.c.h.b16 %v629
      %v671 = vunpack.c.l.b16 %v630
      %v672 = vunpack.c.h.b16 %v630
      %v673 = vunpack.c.l.b16 %v631
      %v674 = vunpack.c.h.b16 %v631
      %v675 = vunpack.c.l.b16 %v632
      %v676 = vunpack.c.h.b16 %v632
      %v677 = vunpack.c.l.b16 %v633
      %v678 = vunpack.c.h.b16 %v633
      %v679 = vunpack.c.l.b16 %v634
      %v680 = vunpack.c.h.b16 %v634
      %v681 = vunpack.c.l.b16 %v635
      %v682 = vunpack.c.h.b16 %v635
      %v683 = vunpack.c.l.b16 %v636
      %v684 = vunpack.c.h.b16 %v636
      %v685 = vpack.c.b16 %v653, %v653
      %v686 = vpack.c.b16 %v654, %v654
      %v687 = vpack.c.b16 %v655, %v655
      %v688 = vpack.c.b16 %v656, %v656
      %v689 = vpack.c.b16 %v657, %v657
      %v690 = vpack.c.b16 %v658, %v658
      %v691 = vpack.c.b16 %v659, %v659
      %v692 = vpack.c.b16 %v660, %v660
      %v693 = vpack.c.b16 %v661, %v661
      %v694 = vpack.c.b16 %v662, %v662
      %v695 = vpack.c.b16 %v663, %v663
      %v696 = vpack.c.b16 %v664, %v664
      %v697 = vpack.c.b16 %v665, %v665
      %v698 = vpack.c.b16 %v666, %v666
      %v699 = vpack.c.b16 %v667, %v667
      %v700 = vpack.c.b16 %v668, %v668
      %v701 = vpack.c.b16 %v669, %v669
      %v702 = vpack.c.b16 %v670, %v670
      %v703 = vpack.c.b16 %v671, %v671
      %v704 = vpack.c.b16 %v672, %v672
      %v705 = vpack.c.b16 %v673, %v673
      %v706 = vpack.c.b16 %v674, %v674
      %v707 = vpack.c.b16 %v675, %v675
      %v708 = vpack.c.b16 %v676, %v676
      %v709 = vpack.c.b16 %v677, %v677
      %v710 = vpack.c.b16 %v678, %v678
      %v711 = vpack.c.b16 %v679, %v679
      %v712 = vpack.c.b16 %v680, %v680
      %v713 = vpack.c.b16 %v681, %v681
      %v714 = vpack.c.b16 %v682, %v682
      %v715 = vpack.c.b16 %v683, %v683
      %v716 = vpack.c.b16 %v684, %v684
      %vm749 = vcmask 519168
      %750 = vst.msk [vmem:[%s223] sm:$0xf] %vm749, %v685
      %751 = vst.msk [vmem:[%s223 + $0x4] sm:$0xf] %vm749, %v686
      %752 = vst.msk [vmem:[%s223 + $0x8] sm:$0xf] %vm749, %v687
      %753 = vst.msk [vmem:[%s223 + $0xc] sm:$0xf] %vm749, %v688
      %754 = vst.msk [vmem:[%s223 + $0x10] sm:$0xf] %vm749, %v689
      %755 = vst.msk [vmem:[%s223 + $0x14] sm:$0xf] %vm749, %v690
      %756 = vst.msk [vmem:[%s223 + $0x18] sm:$0xf] %vm749, %v691
      %757 = vst.msk [vmem:[%s223 + $0x1c] sm:$0xf] %vm749, %v692
      %758 = vst.msk [vmem:[%s223 + $0x20] sm:$0xf] %vm749, %v693
      %759 = vst.msk [vmem:[%s223 + $0x24] sm:$0xf] %vm749, %v694
      %760 = vst.msk [vmem:[%s223 + $0x28] sm:$0xf] %vm749, %v695
      %761 = vst.msk [vmem:[%s223 + $0x2c] sm:$0xf] %vm749, %v696
      %762 = vst.msk [vmem:[%s223 + $0x30] sm:$0xf] %vm749, %v697
      %763 = vst.msk [vmem:[%s223 + $0x34] sm:$0xf] %vm749, %v698
      %764 = vst.msk [vmem:[%s223 + $0x38] sm:$0xf] %vm749, %v699
      %765 = vst.msk [vmem:[%s223 + $0x3c] sm:$0xf] %vm749, %v700
      %766 = vst.msk [vmem:[%s223 + $0x40] sm:$0xf] %vm749, %v701
      %767 = vst.msk [vmem:[%s223 + $0x44] sm:$0xf] %vm749, %v702
      %768 = vst.msk [vmem:[%s223 + $0x48] sm:$0xf] %vm749, %v703
      %769 = vst.msk [vmem:[%s223 + $0x4c] sm:$0xf] %vm749, %v704
      %770 = vst.msk [vmem:[%s223 + $0x50] sm:$0xf] %vm749, %v705
      %771 = vst.msk [vmem:[%s223 + $0x54] sm:$0xf] %vm749, %v706
      %772 = vst.msk [vmem:[%s223 + $0x58] sm:$0xf] %vm749, %v707
      %773 = vst.msk [vmem:[%s223 + $0x5c] sm:$0xf] %vm749, %v708
      %774 = vst.msk [vmem:[%s223 + $0x60] sm:$0xf] %vm749, %v709
      %775 = vst.msk [vmem:[%s223 + $0x64] sm:$0xf] %vm749, %v710
      %776 = vst.msk [vmem:[%s223 + $0x68] sm:$0xf] %vm749, %v711
      %777 = vst.msk [vmem:[%s223 + $0x6c] sm:$0xf] %vm749, %v712
      %778 = vst.msk [vmem:[%s223 + $0x70] sm:$0xf] %vm749, %v713
      %779 = vst.msk [vmem:[%s223 + $0x74] sm:$0xf] %vm749, %v714
      %780 = vst.msk [vmem:[%s223 + $0x78] sm:$0xf] %vm749, %v715
      %781 = vst.msk [vmem:[%s223 + $0x7c] sm:$0xf] %vm749, %v716
      %s782 = smul.u32 32, %s18
      %p783 = scmp.lt.s32.totalorder %s782, 63
      %s784 = scalar_select %p783, %s782, 63
      %p785 = scmp.lt.s32.totalorder %s19, 0
      %s786 = scalar_select %p785, %s19, 0
      %s787 = sadd.s32 %s786, %s784
      %s788 = smul.addr %s787, 4
      %s789 = scalar_lea.vmem %s3, %s788
      // Predicated region
      $region33: #{tpu_custom_call.1} parent=31 // pred_check
        %p790 = pneg %p124
      $region34: #{tpu_custom_call.1} parent=31 // pred_check_branch
        %792 = sbr.rel (%p790) target = $region36
      $region35: #{tpu_custom_call.1} parent=31 // pred_region
        %s793 = smul.u32 32, %s18
      $region36: #{tpu_custom_call.1} parent=31 // pred_fallthru
        _
    $region32: #{tpu_custom_call.1} parent=5 // pred_fallthru
      _
    %p794 = scmp.le.s32.totalorder 2, %s9
    // Predicated region
    $region37: #{tpu_custom_call.1} parent=5 // pred_check
      %p795 = pneg %p794
    $region38: #{tpu_custom_call.1} parent=5 // pred_check_branch
      %797 = sbr.rel (%p795) target = $region40
    $region39: #{tpu_custom_call.1} parent=5 // pred_region
      %s798 = ssub.s32 %s9, 2
      // Predicated region
      $region41: #{tpu_custom_call.1} parent=39 // pred_check
        %p799 = pneg %p130
      $region42: #{tpu_custom_call.1} parent=39 // pred_check_branch
        %801 = sbr.rel (%p799) target = $region44
      $region43: #{tpu_custom_call.1} parent=39 // pred_region
        %s802 = smul.u32 32, %s20
        %p803 = scmp.lt.s32.totalorder %s802, 63
        %s804 = scalar_select %p803, %s802, 63
        %p805 = scmp.lt.s32.totalorder %s21, 0
        %s806 = scalar_select %p805, %s21, 0
        %s807 = sadd.s32 %s806, %s804
        %s808 = smul.addr %s807, 4
        %s809 = scalar_lea.vmem %s3, %s808
      $region44: #{tpu_custom_call.1} parent=39 // pred_fallthru
        _
    $region40: #{tpu_custom_call.1} parent=5 // pred_fallthru
      _
  $region6: #{tpu_custom_call.1} parent=0 // loop_footer
    %s13 = sadd.s32 1, %s9
  $region7: #{tpu_custom_call.1} parent=0 // loop_footer_branch
    %8 = sbr.rel target = $region3
  $region8: #{tpu_custom_call.1} parent=0 // loop_exit
    _

</llo_original>
